<compile_context>
chip_gen: v7x
topology: tpu7x:2x2x1
jax: 0.10.0
libtpu: 0.0.40
codegen_flags: <defaults>
</compile_context>

<pallas_src>
import jax
import jax.numpy as jnp
from jax import lax
from jax.experimental import pallas as pl
from jax.experimental.pallas import tpu as pltpu


def _round_up(x, m):
    return ((x + m - 1) // m) * m


def _gather_onehot_kernel(bounds_ref, idx_ref, pts_ref, out_ref, iota_ref):
    # bounds_ref: SMEM (B * S_tiles * 2,) int32 -- per (batch, s-tile) [lo, hi]
    # idx_ref   : VMEM (1, ts) int32   -- sorted sampled indices, this s-tile
    # pts_ref   : VMEM (C, tn)         -- current N-tile of the point cloud
    # out_ref   : VMEM (C, ts)         -- resident output block == accumulator
    # iota_ref  : VMEM (tn, ts) int32  -- cached row iota (loop-invariant)
    b = pl.program_id(0)
    si = pl.program_id(1)
    n = pl.program_id(2)
    n_s_tiles = pl.num_programs(1)
    tn = pts_ref.shape[-1]

    @pl.when(n == 0)
    def _():
        out_ref[...] = jnp.zeros_like(out_ref)
        iota_ref[...] = lax.broadcasted_iota(jnp.int32, iota_ref.shape, 0)

    lo = bounds_ref[(b * n_s_tiles + si) * 2]
    hi = bounds_ref[(b * n_s_tiles + si) * 2 + 1]
    tile_lo = n * tn

    # Skip N-tiles that cannot contain any of this s-tile's (sorted) indices.
    @pl.when(jnp.logical_and(hi >= tile_lo, lo < tile_lo + tn))
    def _():
        # Offset on the (1, ts) index vector, not on the (tn, ts) iota.
        local = idx_ref[...] - tile_lo                               # (1, ts)
        onehot = (iota_ref[...] == local).astype(pts_ref.dtype)      # (tn, ts)
        prec = (lax.Precision.HIGHEST
                if pts_ref.dtype == jnp.float32 else None)
        out_ref[...] += jnp.dot(
            pts_ref[...], onehot,
            precision=prec,
            preferred_element_type=jnp.float32,
        ).astype(out_ref.dtype)


def random_point_sampling_and_gather(points, num_sample, key):
    """points: (B, C, N) -> samples: (B, C, num_sample). Sampling w/o replacement."""
    B, C, N = points.shape
    S = int(num_sample)
    assert S <= N, "num_sample must be <= number of points"

    # Distinct uniformly-random indices: top_k of iid uniforms (much cheaper
    # than a full argsort for S << N; the resulting order is itself random).
    u = jax.random.uniform(key, (B, N))
    _, idx = lax.top_k(u, S)                                  # (B, S) int32
    idx = idx.astype(jnp.int32)

    # Sort per batch for tile locality / empty-tile skipping; remember the
    # inverse permutation to restore the random sample order afterwards.
    order = jnp.argsort(idx, axis=-1)                         # (B, S)
    sorted_idx = jnp.take_along_axis(idx, order, axis=-1)     # ascending
    inv_order = jnp.argsort(order, axis=-1)                   # (B, S)

    # --- tiling / padding (lane-dense, 128 multiples; VMEM-budgeted caps) ---
    tn = min(1024, _round_up(N, 128))
    N_pad = _round_up(N, tn)
    s128 = _round_up(S, 128)
    ts = min(1024, s128)
    S_pad = _round_up(S, ts)
    n_tiles = N_pad // tn
    s_tiles = S_pad // ts

    pts = points
    if N_pad != N:
        pts = jnp.pad(points, ((0, 0), (0, 0), (0, N_pad - N)))

    if S_pad != S:
        pad_cols = jnp.broadcast_to(sorted_idx[:, -1:], (B, S_pad - S))
        sorted_idx_p = jnp.concatenate([sorted_idx, pad_cols], axis=-1)
    else:
        sorted_idx_p = sorted_idx
    idx_v = sorted_idx_p[:, None, :]                          # (B, 1, S_pad)

    # Per (batch, s-tile) [min, max] index bounds, flattened for SMEM prefetch.
    tiles = sorted_idx_p.reshape(B, s_tiles, ts)
    bounds = jnp.stack([tiles[:, :, 0], tiles[:, :, -1]], axis=-1)
    bounds = bounds.reshape(-1).astype(jnp.int32)             # (B*s_tiles*2,)

    out = pl.pallas_call(
        _gather_onehot_kernel,
        out_shape=jax.ShapeDtypeStruct((B, C, S_pad), points.dtype),
        grid_spec=pltpu.PrefetchScalarGridSpec(
            num_scalar_prefetch=1,
            grid=(B, s_tiles, n_tiles),
            in_specs=[
                pl.BlockSpec((None, 1, ts), lambda b, si, n, bnd: (b, 0, si)),
                pl.BlockSpec((None, C, tn), lambda b, si, n, bnd: (b, 0, n)),
            ],
            out_specs=pl.BlockSpec((None, C, ts),
                                   lambda b, si, n, bnd: (b, 0, si)),
            scratch_shapes=[pltpu.VMEM((tn, ts), jnp.int32)],
        ),
        compiler_params=pltpu.CompilerParams(
            dimension_semantics=("parallel", "parallel", "arbitrary"),
            vmem_limit_bytes=32 * 1024 * 1024,
        ),
    )(bounds, idx_v, pts)                                     # (B, C, S_pad)

    # Restore random permutation-prefix order and drop sample padding.
    return jnp.take_along_axis(out, inv_order[:, None, :], axis=2)


class RandomPointSampling:
    """JAX/Pallas port of the PyTorch RandomPointSampling module."""

    def __init__(self, num_sample):
        self.num_sample = num_sample

    def __call__(self, points, key):
        return random_point_sampling_and_gather(points, self.num_sample, key)


if __name__ == "__main__":
    key = jax.random.PRNGKey(0)
    k_pts, k_samp = jax.random.split(key)

    B, C, N = 2, 4, 16
    num_sample = 8

    points = jax.random.normal(k_pts, (B, C, N), dtype=jnp.float32)

    module = RandomPointSampling(num_sample)
    samples = jax.block_until_ready(module(points, k_samp))

    assert samples.shape == (B, C, num_sample), samples.shape
    assert samples.dtype == points.dtype

    # Correctness check against a pure-JAX reference gather using the same
    # (deterministic) sampled indices.
    u = jax.random.uniform(k_samp, (B, N))
    _, ref_idx = jax.lax.top_k(u, num_sample)
    ref = jnp.take_along_axis(points, ref_idx[:, None, :].astype(jnp.int32),
                              axis=2)
    assert jnp.allclose(samples, ref), "mismatch vs reference gather"

    print("KERNEL_OK")
</pallas_src>

<mosaic_0001>
module attributes {stable_mosaic.version = 11 : i64} {
  func.func @_gather_onehot_kernel(%arg0: i32, %arg1: i32, %arg2: i32, %arg3: memref<4xi32, #tpu.memory_space<smem>>, %arg4: memref<1x1x128xi32, #tpu.memory_space<vmem>>, %arg5: memref<1x4x128xf32, #tpu.memory_space<vmem>>, %arg6: memref<1x4x128xf32, #tpu.memory_space<vmem>>, %arg7: memref<128x128xi32, #tpu.memory_space<vmem>>) attributes {dimension_semantics = [#tpu.dimension_semantics<parallel>, #tpu.dimension_semantics<parallel>, #tpu.dimension_semantics<arbitrary>], iteration_bounds = array<i64: 2, 1, 1>, scalar_prefetch = 1 : i64, scratch_operands = 1 : i64, tpu.core_type = #tpu.core_type<tc>, window_params = [{transform_indices = @transform_0, window_bounds = array<i64: 1, 1, 128>}, {transform_indices = @transform_1, window_bounds = array<i64: 1, 4, 128>}, {transform_indices = @transform_2, window_bounds = array<i64: 1, 4, 128>}]} {
    %c0_i32 = arith.constant 0 : i32
    %0 = arith.cmpi eq, %arg2, %c0_i32 : i32
    %1 = arith.extui %0 : i1 to i32
    %c0_i32_0 = arith.constant 0 : i32
    %2 = arith.cmpi ne, %1, %c0_i32_0 : i32
    scf.if %2 {
      %cst = arith.constant 0.000000e+00 : f32
      %21 = vector.broadcast %cst : f32 to vector<4x128xf32>
      %c0 = arith.constant 0 : index
      %c0_6 = arith.constant 0 : index
      %c0_7 = arith.constant 0 : index
      %22 = vector.load %arg6[%c0, %c0_6, %c0_7] : memref<1x4x128xf32, #tpu.memory_space<vmem>>, vector<1x4x128xf32>
      %23 = vector.shape_cast %22 : vector<1x4x128xf32> to vector<4x128xf32>
      %24 = vector.shape_cast %21 : vector<4x128xf32> to vector<1x4x128xf32>
      tpu.vector_store %arg6[%c0, %c0_6, %c0_7], %24 {strides = array<i32>} : memref<1x4x128xf32, #tpu.memory_space<vmem>>, vector<1x4x128xf32>,
      %25 = tpu.iota {dimensions = array<i32: 0>} : vector<128x128xi32>
      %c0_8 = arith.constant 0 : index
      %c0_9 = arith.constant 0 : index
      %26 = vector.load %arg7[%c0_8, %c0_9] : memref<128x128xi32, #tpu.memory_space<vmem>>, vector<128x128xi32>
      tpu.vector_store %arg7[%c0_8, %c0_9], %25 {strides = array<i32>} : memref<128x128xi32, #tpu.memory_space<vmem>>, vector<128x128xi32>,
    } else {
    }
    %c1_i32 = arith.constant 1 : i32
    %3 = arith.muli %arg0, %c1_i32 : i32
    %4 = arith.addi %3, %arg1 : i32
    %c2_i32 = arith.constant 2 : i32
    %5 = arith.muli %4, %c2_i32 : i32
    %6 = arith.index_cast %5 : i32 to index
    %7 = memref.load %arg3[%6] : memref<4xi32, #tpu.memory_space<smem>>
    %c1_i32_1 = arith.constant 1 : i32
    %8 = arith.muli %arg0, %c1_i32_1 : i32
    %9 = arith.addi %8, %arg1 : i32
    %c2_i32_2 = arith.constant 2 : i32
    %10 = arith.muli %9, %c2_i32_2 : i32
    %c1_i32_3 = arith.constant 1 : i32
    %11 = arith.addi %10, %c1_i32_3 : i32
    %12 = arith.index_cast %11 : i32 to index
    %13 = memref.load %arg3[%12] : memref<4xi32, #tpu.memory_space<smem>>
    %c128_i32 = arith.constant 128 : i32
    %14 = arith.muli %arg2, %c128_i32 : i32
    %15 = arith.cmpi sge, %13, %14 : i32
    %c128_i32_4 = arith.constant 128 : i32
    %16 = arith.addi %14, %c128_i32_4 : i32
    %17 = arith.cmpi slt, %7, %16 : i32
    %18 = arith.andi %15, %17 : i1
    %19 = arith.extui %18 : i1 to i32
    %c0_i32_5 = arith.constant 0 : i32
    %20 = arith.cmpi ne, %19, %c0_i32_5 : i32
    scf.if %20 {
      %c0 = arith.constant 0 : index
      %c0_6 = arith.constant 0 : index
      %c0_7 = arith.constant 0 : index
      %21 = vector.load %arg4[%c0, %c0_6, %c0_7] : memref<1x1x128xi32, #tpu.memory_space<vmem>>, vector<1x1x128xi32>
      %22 = vector.shape_cast %21 : vector<1x1x128xi32> to vector<1x128xi32>
      %23 = vector.broadcast %14 : i32 to vector<1x128xi32>
      %24 = arith.subi %22, %23 : vector<1x128xi32>
      %c0_8 = arith.constant 0 : index
      %c0_9 = arith.constant 0 : index
      %25 = vector.load %arg7[%c0_8, %c0_9] : memref<128x128xi32, #tpu.memory_space<vmem>>, vector<128x128xi32>
      %26 = vector.broadcast %24 : vector<1x128xi32> to vector<128x128xi32>
      %27 = arith.cmpi eq, %25, %26 : vector<128x128xi32>
      %28 = arith.extui %27 : vector<128x128xi1> to vector<128x128xi32>
      %29 = arith.sitofp %28 : vector<128x128xi32> to vector<128x128xf32>
      %c0_10 = arith.constant 0 : index
      %c0_11 = arith.constant 0 : index
      %c0_12 = arith.constant 0 : index
      %30 = vector.load %arg6[%c0_10, %c0_11, %c0_12] : memref<1x4x128xf32, #tpu.memory_space<vmem>>, vector<1x4x128xf32>
      %31 = vector.shape_cast %30 : vector<1x4x128xf32> to vector<4x128xf32>
      %c0_13 = arith.constant 0 : index
      %c0_14 = arith.constant 0 : index
      %c0_15 = arith.constant 0 : index
      %32 = vector.load %arg5[%c0_13, %c0_14, %c0_15] : memref<1x4x128xf32, #tpu.memory_space<vmem>>, vector<1x4x128xf32>
      %33 = vector.shape_cast %32 : vector<1x4x128xf32> to vector<4x128xf32>
      %cst = arith.constant dense<0.000000e+00> : vector<4x128xf32>
      %34 = tpu.matmul %33, %29, %cst {dimension_numbers = #tpu.dot_dimension_numbers<[1], [0], [0], [1], [0, 0, 1, 1], [], []>, precision = #tpu.contract_precision<fp32>} : vector<4x128xf32>, vector<128x128xf32>, vector<4x128xf32> -> vector<4x128xf32>
      %35 = arith.addf %31, %34 : vector<4x128xf32>
      %c0_16 = arith.constant 0 : index
      %c0_17 = arith.constant 0 : index
      %c0_18 = arith.constant 0 : index
      %36 = vector.load %arg6[%c0_16, %c0_17, %c0_18] : memref<1x4x128xf32, #tpu.memory_space<vmem>>, vector<1x4x128xf32>
      %37 = vector.shape_cast %36 : vector<1x4x128xf32> to vector<4x128xf32>
      %38 = vector.shape_cast %35 : vector<4x128xf32> to vector<1x4x128xf32>
      tpu.vector_store %arg6[%c0_16, %c0_17, %c0_18], %38 {strides = array<i32>} : memref<1x4x128xf32, #tpu.memory_space<vmem>>, vector<1x4x128xf32>,
    } else {
    }
    return
  }
  func.func @transform_0(%arg0: i32, %arg1: i32, %arg2: i32, %arg3: memref<4xi32, #tpu.memory_space<smem>>) -> (i32, i32, i32) {
    %c0_i32 = arith.constant 0 : i32
    %c0_i32_0 = arith.constant 0 : i32
    return %arg0, %c0_i32, %arg1 : i32, i32, i32
  }
  func.func @transform_1(%arg0: i32, %arg1: i32, %arg2: i32, %arg3: memref<4xi32, #tpu.memory_space<smem>>) -> (i32, i32, i32) {
    %c0_i32 = arith.constant 0 : i32
    %c0_i32_0 = arith.constant 0 : i32
    return %arg0, %c0_i32, %arg2 : i32, i32, i32
  }
  func.func @transform_2(%arg0: i32, %arg1: i32, %arg2: i32, %arg3: memref<4xi32, #tpu.memory_space<smem>>) -> (i32, i32, i32) {
    %c0_i32 = arith.constant 0 : i32
    %c0_i32_0 = arith.constant 0 : i32
    return %arg0, %c0_i32, %arg1 : i32, i32, i32
  }
}

</mosaic_0001>

<llo_original>
// kernel: tpu_custom_call.1
$region0: #{tpu_custom_call.1}
  #allocation0 [shape = 'u32[]', space=smem, size = 0x4, offset = 0x4, fixed_abs, tag = 'smem constant byte address 0x4 - core index']
  #allocation1 [shape = 'u32[144,128]{1,0:T(1,128)}', space=vmem, size = 0x12000, scoped, tag = 'internal scratch']
  #allocation2 [shape = 's32[128,128]{1,0:T(8,128)}', space=vmem, size = 0x10000, scoped, tag = 'scratch operand']
  #allocation3 [shape = 's32[1]{0}', space=sflag, size = 0x4, scoped, tag = 'scoped memory for tpu_custom_call.1']
  #allocation4 [shape = 'u8[512]{0}', space=smem, size = 0x200, scoped, tag = 'prefetched SMEM operand 0']
  %s0 = inlined_call_operand.hbm [shape: s32[4], index: 0, kind: input, shape index: {}]
  %s1 = inlined_call_operand.vmem [shape: s32[2,1,128], index: 1, kind: input, shape index: {}]
  %s2 = inlined_call_operand.hbm [shape: f32[2,4,128], index: 2, kind: input, shape index: {}]
  %s3 = inlined_call_operand.hbm [shape: f32[2,4,128], index: 3, kind: output, shape index: {}]
  %s4 = sld [smem:[#allocation0]]
  $region53: #{tpu_custom_call.1} parent=0
    _
  %s6 = ssub.s32 1, %s4
  %s7 = scalar_select 0, %s6, %s4
  %9 = dma.hbm_to_smem %s0, 16, [#allocation4], [#allocation3]
  %10 = dma.done [#allocation3], 16
  %11 = sfence
  $region1: #{tpu_custom_call.1} parent=0
    #allocation5 [shape = 'u8[4096]{0}', space=vmem, size = 0x1000, scoped, tag = 'input window, operand 2']
    #allocation6 [shape = 's32[2]{0}', space=sflag, size = 0x8, scoped, tag = 'scoped memory for tpu_custom_call.1']
    #allocation7 [shape = 's32[2]{0}', space=sflag, size = 0x8, scoped, tag = 'scoped memory for tpu_custom_call.1']
    #allocation8 [shape = 'u8[4096]{0}', space=vmem, size = 0x1000, scoped, tag = 'output window, operand 0']
    %12 = vsyncpa [#allocation6], 0
    %s13 = scalar_lea.sflag [#allocation6], 1
    %14 = vsyncpa %s13, 0
    %15 = vsyncpa [#allocation7], 0
    %s16 = scalar_lea.sflag [#allocation7], 1
    %17 = vsyncpa %s16, 0
    loop: start=0, step=1, limit=4
    $region2: #{tpu_custom_call.1} parent=1 // loop_pre_header
      _
    $region3: #{tpu_custom_call.1} parent=1 // loop_header
      %s19 = sphi 0, %s23
      %p20 = scmp.ge.s32.totalorder %s19, 4
      %s26 = sphi 0, %s45
      %s27 = sphi 0, %s41
      %s28 = sphi 0, %s37
      %s29 = sphi 0, %s26
      %s30 = sphi 0, %s27
      %s31 = sphi 0, %s28
      %s32 = sphi 0, %s29
      %s33 = sphi 0, %s30
      %s34 = sphi 0, %s31
      %s50 = sphi 0, %s52
      %s53 = sphi 0, %s50
      %s54 = sphi 0, %s53
      %s70 = sphi 0, %s54
      %s78 = sphi 0, %s80
      %s81 = sphi 0, %s78
      %s82 = sphi 0, %s81
      %s98 = sphi 0, %s82
      %s106 = sphi 0, %s108
      %s109 = sphi 0, %s106
      %s110 = sphi 0, %s109
      %s126 = sphi 0, %s110
    $region4: #{tpu_custom_call.1} parent=1 // loop_header_branch
      %22 = sbr.rel (%p20) target = $region8
    $region5: #{tpu_custom_call.1} parent=1 // loop_body
      %s24 = ssub.s32 %s19, 1
      %s25 = ssub.s32 %s19, 2
      %s35 = sadd.s32 1, %s28
      %p36 = scmp.ge.s32.totalorder %s35, 1
      %s37 = scalar_select %p36, 0, %s35
      %s38 = sadd.s32 1, %s27
      %s39 = scalar_select %p36, %s38, %s27
      %p40 = scmp.ge.s32.totalorder %s39, 1
      %s41 = scalar_select %p40, 0, %s39
      %s42 = sadd.s32 1, %s26
      %s43 = scalar_select %p40, %s42, %s26
      %p44 = scmp.ge.s32.totalorder %s43, 2
      %s45 = scalar_select %p44, 0, %s43
      %s46 = ssub.s32 %s26, %s45
      %s47 = ssub.s32 %s27, %s41
      %s48 = sor.u32 %s46, %s47
      %p49 = scmp.eq.s32.totalorder %s48, 0
      %s51 = sadd.s32 %s50, 1
      %s52 = scalar_select %p49, %s50, %s51
      %p55 = pneg %p49
      %p56 = scmp.eq.s32.totalorder %s19, 1
      %p57 = por %p55, %p56
      %p58 = scmp.ne.s32.totalorder %s50, %s53
      %p59 = scmp.eq.s32.totalorder %s19, 0
      %p60 = por %p58, %p59
      %p61 = scmp.ne.s32.totalorder %s50, %s53
      %p62 = scmp.eq.s32.totalorder %s24, 1
      %p63 = por %p61, %p62
      %p64 = scmp.ne.s32.totalorder %s53, %s54
      %p65 = scmp.eq.s32.totalorder %s24, 0
      %p66 = por %p64, %p65
      %p67 = scmp.ne.s32.totalorder %s53, %s54
      %p68 = scmp.eq.s32.totalorder %s25, 1
      %p69 = por %p67, %p68
      %p71 = scmp.ne.s32.totalorder %s54, %s70
      %p72 = scmp.eq.s32.totalorder %s25, 0
      %p73 = por %p71, %p72
      %s74 = ssub.s32 %s26, %s45
      %s75 = ssub.s32 %s28, %s37
      %s76 = sor.u32 %s74, %s75
      %p77 = scmp.eq.s32.totalorder %s76, 0
      %s79 = sadd.s32 %s78, 1
      %s80 = scalar_select %p77, %s78, %s79
      %p83 = pneg %p77
      %p84 = scmp.eq.s32.totalorder %s19, 1
      %p85 = por %p83, %p84
      %p86 = scmp.ne.s32.totalorder %s78, %s81
      %p87 = scmp.eq.s32.totalorder %s19, 0
      %p88 = por %p86, %p87
      %p89 = scmp.ne.s32.totalorder %s78, %s81
      %p90 = scmp.eq.s32.totalorder %s24, 1
      %p91 = por %p89, %p90
      %p92 = scmp.ne.s32.totalorder %s81, %s82
      %p93 = scmp.eq.s32.totalorder %s24, 0
      %p94 = por %p92, %p93
      %p95 = scmp.ne.s32.totalorder %s81, %s82
      %p96 = scmp.eq.s32.totalorder %s25, 1
      %p97 = por %p95, %p96
      %p99 = scmp.ne.s32.totalorder %s82, %s98
      %p100 = scmp.eq.s32.totalorder %s25, 0
      %p101 = por %p99, %p100
      %s102 = ssub.s32 %s26, %s45
      %s103 = ssub.s32 %s27, %s41
      %s104 = sor.u32 %s102, %s103
      %p105 = scmp.eq.s32.totalorder %s104, 0
      %s107 = sadd.s32 %s106, 1
      %s108 = scalar_select %p105, %s106, %s107
      %p111 = pneg %p105
      %p112 = scmp.eq.s32.totalorder %s19, 1
      %p113 = por %p111, %p112
      %p114 = scmp.ne.s32.totalorder %s106, %s109
      %p115 = scmp.eq.s32.totalorder %s19, 0
      %p116 = por %p114, %p115
      %p117 = scmp.ne.s32.totalorder %s106, %s109
      %p118 = scmp.eq.s32.totalorder %s24, 1
      %p119 = por %p117, %p118
      %p120 = scmp.ne.s32.totalorder %s109, %s110
      %p121 = scmp.eq.s32.totalorder %s24, 0
      %p122 = por %p120, %p121
      %p123 = scmp.ne.s32.totalorder %s109, %s110
      %p124 = scmp.eq.s32.totalorder %s25, 1
      %p125 = por %p123, %p124
      %p127 = scmp.ne.s32.totalorder %s110, %s126
      %p128 = scmp.eq.s32.totalorder %s25, 0
      %p129 = por %p127, %p128
      %p130 = scmp.le.s32.totalorder 1, %s19
      %p131 = scmp.lt.s32.totalorder %s19, 3
      %p132 = pnand %p130, %p131
      %p133 = pneg %p132
      // Predicated region
      $region9: #{tpu_custom_call.1} parent=5 // pred_check
        _
      $region10: #{tpu_custom_call.1} parent=5 // pred_check_branch
        %135 = sbr.rel (%p132) target = $region12
      $region11: #{tpu_custom_call.1} parent=5 // pred_region
        %s136 = ssub.s32 %s19, 1
      $region12: #{tpu_custom_call.1} parent=5 // pred_fallthru
        _
      %p137 = scmp.lt.s32.totalorder %s19, 2
      // Predicated region
      $region13: #{tpu_custom_call.1} parent=5 // pred_check
        %p138 = pneg %p137
      $region14: #{tpu_custom_call.1} parent=5 // pred_check_branch
        %140 = sbr.rel (%p138) target = $region16
      $region15: #{tpu_custom_call.1} parent=5 // pred_region
        // Predicated region
        $region17: #{tpu_custom_call.1} parent=15 // pred_check
          %p141 = pneg %p60
        $region18: #{tpu_custom_call.1} parent=15 // pred_check_branch
          %143 = sbr.rel (%p141) target = $region20
        $region19: #{tpu_custom_call.1} parent=15 // pred_region
          %p144 = scmp.lt.s32.totalorder %s26, 1
          %s145 = scalar_select %p144, %s26, 1
          %p146 = scmp.lt.s32.totalorder %s27, 0
          %s147 = scalar_select %p146, %s27, 0
          %s148 = sadd.s32 %s147, %s145
          %s149 = scalar_lea.vmem %s1, %s148
        $region20: #{tpu_custom_call.1} parent=15 // pred_fallthru
          _
        // Predicated region
        $region21: #{tpu_custom_call.1} parent=15 // pred_check
          %p150 = pneg %p88
        $region22: #{tpu_custom_call.1} parent=15 // pred_check_branch
          %152 = sbr.rel (%p150) target = $region24
        $region23: #{tpu_custom_call.1} parent=15 // pred_region
          %s153 = sand.u32 %s78, 1
          %s154 = scalar_lea.sflag [#allocation6], %s153
          %s155 = sand.u32 %s78, 1
          %s156 = smul.addr %s155, 4
          %s157 = scalar_lea.vmem [#allocation5], %s156
          %s159 = ssub.s32 64, 64
          %160 = vsyncadd %s154, %s159
          %s161 = sadd.s32 %s28, %s26
          %s162 = smul.addr %s161, 64
          %s163 = scalar_lea.hbm %s2, %s162
          %s165 = sshll.u32 %s157, 4
          %s166 = int_to_ptr.vmem [resolvable:$true] %s165
          %168 = dma.hbm_to_vmem [thread:$0]  %s163, 64, %s166, %s154
        $region24: #{tpu_custom_call.1} parent=15 // pred_fallthru
          _
      $region16: #{tpu_custom_call.1} parent=5 // pred_fallthru
        _
      %p169 = scmp.le.s32.totalorder 1, %s19
      %p170 = scmp.lt.s32.totalorder %s19, 3
      %p171 = pnand %p169, %p170
      %p172 = pneg %p171
      // Predicated region
      $region25: #{tpu_custom_call.1} parent=5 // pred_check
        _
      $region26: #{tpu_custom_call.1} parent=5 // pred_check_branch
        %174 = sbr.rel (%p171) target = $region28
      $region27: #{tpu_custom_call.1} parent=5 // pred_region
        %s175 = ssub.s32 %s19, 1
        %s176 = sand.u32 %s81, 1
        %s177 = scalar_lea.sflag [#allocation6], %s176
        %s178 = sand.u32 %s81, 1
        %s179 = smul.addr %s178, 4
        %s180 = scalar_lea.vmem [#allocation5], %s179
        // Predicated region
        $region29: #{tpu_custom_call.1} parent=27 // pred_check
          %p181 = pneg %p94
        $region30: #{tpu_custom_call.1} parent=27 // pred_check_branch
          %183 = sbr.rel (%p181) target = $region32
        $region31: #{tpu_custom_call.1} parent=27 // pred_region
          %184 = dma.done %s177, 64
        $region32: #{tpu_custom_call.1} parent=27 // pred_fallthru
          _
        %p185 = scmp.lt.s32.totalorder %s29, 1
        %s186 = scalar_select %p185, %s29, 1
        %p187 = scmp.lt.s32.totalorder %s30, 0
        %s188 = scalar_select %p187, %s30, 0
        %s189 = sadd.s32 %s188, %s186
        %s190 = scalar_lea.vmem %s1, %s189
        %p191 = pneg %p66
        %p192 = pneg %p63
        %s193 = sand.u32 %s81, 1
        %s194 = scalar_lea.sflag [#allocation6], %s193
        %s195 = sand.u32 %s81, 1
        %s196 = smul.addr %s195, 4
        %s197 = scalar_lea.vmem [#allocation5], %s196
        %p198 = pneg %p94
        %p199 = pneg %p91
        %p200 = pneg %p122
        %p201 = pneg %p119
        %s202 = sand.u32 %s109, 1
        %s203 = scalar_lea.sflag [#allocation7], %s202
        %s204 = sand.u32 %s109, 1
        %s205 = smul.addr %s204, 4
        %s206 = scalar_lea.vmem [#allocation8], %s205
        %p207 = scmp.lt.s32.totalorder %s29, 1
        %s208 = scalar_select %p207, %s29, 1
        %p209 = scmp.lt.s32.totalorder %s30, 0
        %s210 = scalar_select %p209, %s30, 0
        %s211 = sadd.s32 %s210, %s208
        %s212 = scalar_lea.vmem %s1, %s211
        %p213 = scmp.eq.s32.totalorder %s31, 0
        // Predicated region
        $region33: #{tpu_custom_call.1} parent=27 // pred_check
          %p214 = pneg %p213
        $region34: #{tpu_custom_call.1} parent=27 // pred_check_branch
          %216 = sbr.rel (%p214) target = $region36
        $region35: #{tpu_custom_call.1} parent=27 // pred_region
          %217 = vst [vmem:[%s206] sm:$0xf] 0.0
          %v218 = vlaneseq
          %v219 = vshrl.u32 %v218, 7
          %v220 = vadd.s32 %v219, 8
          %v221 = vadd.s32 %v219, 16
          %v222 = vadd.s32 %v219, 24
          %v223 = vadd.s32 %v219, 32
          %v224 = vadd.s32 %v219, 40
          %v225 = vadd.s32 %v219, 48
          %v226 = vadd.s32 %v219, 56
          %v227 = vadd.s32 %v219, 64
          %v228 = vadd.s32 %v219, 72
          %v229 = vadd.s32 %v219, 80
          %v230 = vadd.s32 %v219, 88
          %v231 = vadd.s32 %v219, 96
          %v232 = vadd.s32 %v219, 104
          %v233 = vadd.s32 %v219, 112
          %v234 = vadd.s32 %v219, 120
          %235 = vst [vmem:[#allocation2] sm:$0xff] %v219
          %236 = vst [vmem:[#allocation2 + $0x8] sm:$0xff] %v220
          %237 = vst [vmem:[#allocation2 + $0x10] sm:$0xff] %v221
          %238 = vst [vmem:[#allocation2 + $0x18] sm:$0xff] %v222
          %239 = vst [vmem:[#allocation2 + $0x20] sm:$0xff] %v223
          %240 = vst [vmem:[#allocation2 + $0x28] sm:$0xff] %v224
          %241 = vst [vmem:[#allocation2 + $0x30] sm:$0xff] %v225
          %242 = vst [vmem:[#allocation2 + $0x38] sm:$0xff] %v226
          %243 = vst [vmem:[#allocation2 + $0x40] sm:$0xff] %v227
          %244 = vst [vmem:[#allocation2 + $0x48] sm:$0xff] %v228
          %245 = vst [vmem:[#allocation2 + $0x50] sm:$0xff] %v229
          %246 = vst [vmem:[#allocation2 + $0x58] sm:$0xff] %v230
          %247 = vst [vmem:[#allocation2 + $0x60] sm:$0xff] %v231
          %248 = vst [vmem:[#allocation2 + $0x68] sm:$0xff] %v232
          %249 = vst [vmem:[#allocation2 + $0x70] sm:$0xff] %v233
          %250 = vst [vmem:[#allocation2 + $0x78] sm:$0xff] %v234
        $region36: #{tpu_custom_call.1} parent=27 // pred_fallthru
          _
        %s251 = sadd.s32 %s29, %s30
        %s252 = smul.u32 %s251, 2
        %s253 = sld [smem:[#allocation4 + %s252]]
        %s254 = sadd.s32 %s252, 1
        %s255 = sld [smem:[#allocation4 + %s254]]
        %s256 = smul.u32 %s31, 128
        %p257 = scmp.ge.s32.totalorder %s255, %s256
        %s258 = sadd.s32 %s256, 128
        %p259 = scmp.lt.s32.totalorder %s253, %s258
        %p260 = pnand %p257, %p259
        %p261 = pneg %p260
        // Predicated region
        $region37: #{tpu_custom_call.1} parent=27 // pred_check
          _
        $region38: #{tpu_custom_call.1} parent=27 // pred_check_branch
          %263 = sbr.rel (%p260) target = $region40
        $region39: #{tpu_custom_call.1} parent=27 // pred_region
          %v264 = vld [vmem:[%s212] sm:$0x1]
          %v265 = vstv %s256
          %v266 = vsub.s32 %v264, %v265
          %v267 = vld [vmem:[#allocation2] sm:$0xff]
          %v268 = vld [vmem:[#allocation2 + $0x8] sm:$0xff]
          %v269 = vld [vmem:[#allocation2 + $0x10] sm:$0xff]
          %v270 = vld [vmem:[#allocation2 + $0x18] sm:$0xff]
          %v271 = vld [vmem:[#allocation2 + $0x20] sm:$0xff]
          %v272 = vld [vmem:[#allocation2 + $0x28] sm:$0xff]
          %v273 = vld [vmem:[#allocation2 + $0x30] sm:$0xff]
          %v274 = vld [vmem:[#allocation2 + $0x38] sm:$0xff]
          %v275 = vld [vmem:[#allocation2 + $0x40] sm:$0xff]
          %v276 = vld [vmem:[#allocation2 + $0x48] sm:$0xff]
          %v277 = vld [vmem:[#allocation2 + $0x50] sm:$0xff]
          %v278 = vld [vmem:[#allocation2 + $0x58] sm:$0xff]
          %v279 = vld [vmem:[#allocation2 + $0x60] sm:$0xff]
          %v280 = vld [vmem:[#allocation2 + $0x68] sm:$0xff]
          %v281 = vld [vmem:[#allocation2 + $0x70] sm:$0xff]
          %v282 = vld [vmem:[#allocation2 + $0x78] sm:$0xff]
          %v283 = vlaneseq
          %v284 = vshrl.u32 %v283, 7
          %v285 = vsub.s32 0, %v284
          %v286 = vrot.slane %v266, %v285
          %vm287 = vcmp.eq.s32.totalorder %v267, %v286
          %vm288 = vcmp.eq.s32.totalorder %v268, %v286
          %vm289 = vcmp.eq.s32.totalorder %v269, %v286
          %vm290 = vcmp.eq.s32.totalorder %v270, %v286
          %vm291 = vcmp.eq.s32.totalorder %v271, %v286
          %vm292 = vcmp.eq.s32.totalorder %v272, %v286
          %vm293 = vcmp.eq.s32.totalorder %v273, %v286
          %vm294 = vcmp.eq.s32.totalorder %v274, %v286
          %vm295 = vcmp.eq.s32.totalorder %v275, %v286
          %vm296 = vcmp.eq.s32.totalorder %v276, %v286
          %vm297 = vcmp.eq.s32.totalorder %v277, %v286
          %vm298 = vcmp.eq.s32.totalorder %v278, %v286
          %vm299 = vcmp.eq.s32.totalorder %v279, %v286
          %vm300 = vcmp.eq.s32.totalorder %v280, %v286
          %vm301 = vcmp.eq.s32.totalorder %v281, %v286
          %vm302 = vcmp.eq.s32.totalorder %v282, %v286
          %v303 = vsel %vm287, 1, 0
          %v304 = vsel %vm288, 1, 0
          %v305 = vsel %vm289, 1, 0
          %v306 = vsel %vm290, 1, 0
          %v307 = vsel %vm291, 1, 0
          %v308 = vsel %vm292, 1, 0
          %v309 = vsel %vm293, 1, 0
          %v310 = vsel %vm294, 1, 0
          %v311 = vsel %vm295, 1, 0
          %v312 = vsel %vm296, 1, 0
          %v313 = vsel %vm297, 1, 0
          %v314 = vsel %vm298, 1, 0
          %v315 = vsel %vm299, 1, 0
          %v316 = vsel %vm300, 1, 0
          %v317 = vsel %vm301, 1, 0
          %v318 = vsel %vm302, 1, 0
          %v319 = vcvt.s32.f32 %v303
          %v320 = vcvt.s32.f32 %v304
          %v321 = vcvt.s32.f32 %v305
          %v322 = vcvt.s32.f32 %v306
          %v323 = vcvt.s32.f32 %v307
          %v324 = vcvt.s32.f32 %v308
          %v325 = vcvt.s32.f32 %v309
          %v326 = vcvt.s32.f32 %v310
          %v327 = vcvt.s32.f32 %v311
          %v328 = vcvt.s32.f32 %v312
          %v329 = vcvt.s32.f32 %v313
          %v330 = vcvt.s32.f32 %v314
          %v331 = vcvt.s32.f32 %v315
          %v332 = vcvt.s32.f32 %v316
          %v333 = vcvt.s32.f32 %v317
          %v334 = vcvt.s32.f32 %v318
          %v335 = vld [vmem:[%s206] sm:$0xf]
          %v336 = vld [vmem:[%s180] sm:$0xf]
          %337 = vmatprep.subr.mxu0 0.0
          %v338 = vand.u32 %v319, 4294901760
          %339 = vmatpush1.msra.mxu0 %v338
          %340 = vmatprep.subr.mxu0 0.0
          %v341 = vand.u32 %v320, 4294901760
          %342 = vmatpush1.msra.mxu0 %v341
          %343 = vmatprep.subr.mxu0 0.0
          %v344 = vand.u32 %v321, 4294901760
          %345 = vmatpush1.msra.mxu0 %v344
          %346 = vmatprep.subr.mxu0 0.0
          %v347 = vand.u32 %v322, 4294901760
          %348 = vmatpush1.msra.mxu0 %v347
          %349 = vmatprep.subr.mxu0 0.0
          %v350 = vand.u32 %v323, 4294901760
          %351 = vmatpush1.msra.mxu0 %v350
          %352 = vmatprep.subr.mxu0 0.0
          %v353 = vand.u32 %v324, 4294901760
          %354 = vmatpush1.msra.mxu0 %v353
          %355 = vmatprep.subr.mxu0 0.0
          %v356 = vand.u32 %v325, 4294901760
          %357 = vmatpush1.msra.mxu0 %v356
          %358 = vmatprep.subr.mxu0 0.0
          %v359 = vand.u32 %v326, 4294901760
          %360 = vmatpush1.msra.mxu0 %v359
          %361 = vmatprep.subr.mxu0 0.0
          %v362 = vand.u32 %v327, 4294901760
          %363 = vmatpush1.msra.mxu0 %v362
          %364 = vmatprep.subr.mxu0 0.0
          %v365 = vand.u32 %v328, 4294901760
          %366 = vmatpush1.msra.mxu0 %v365
          %367 = vmatprep.subr.mxu0 0.0
          %v368 = vand.u32 %v329, 4294901760
          %369 = vmatpush1.msra.mxu0 %v368
          %370 = vmatprep.subr.mxu0 0.0
          %v371 = vand.u32 %v330, 4294901760
          %372 = vmatpush1.msra.mxu0 %v371
          %373 = vmatprep.subr.mxu0 0.0
          %v374 = vand.u32 %v331, 4294901760
          %375 = vmatpush1.msra.mxu0 %v374
          %376 = vmatprep.subr.mxu0 0.0
          %v377 = vand.u32 %v332, 4294901760
          %378 = vmatpush1.msra.mxu0 %v377
          %379 = vmatprep.subr.mxu0 0.0
          %v380 = vand.u32 %v333, 4294901760
          %381 = vmatpush1.msra.mxu0 %v380
          %382 = vmatprep.subr.mxu0 0.0
          %v383 = vand.u32 %v334, 4294901760
          %384 = vmatpush1.msra.mxu0 %v383
          %385 = vmatprep.subr.mxu0 0.0
          %386 = vmatpush1.msra.mxu0 0.0
          %387 = vmatprep.subr.mxu0 0.0
          %388 = vmatpush1.msra.mxu0 0.0
          %389 = vmatprep.subr.mxu0 0.0
          %390 = vmatpush1.msra.mxu0 0.0
          %391 = vmatprep.subr.mxu0 0.0
          %392 = vmatpush1.msra.mxu0 0.0
          %393 = vmatprep.subr.mxu0 0.0
          %394 = vmatpush1.msra.mxu0 0.0
          %395 = vmatprep.subr.mxu0 0.0
          %396 = vmatpush1.msra.mxu0 0.0
          %397 = vmatprep.subr.mxu0 0.0
          %398 = vmatpush1.msra.mxu0 0.0
          %399 = vmatprep.subr.mxu0 0.0
          %400 = vmatpush1.msra.mxu0 0.0
          %401 = vmatprep.subr.mxu0 0.0
          %402 = vmatpush1.msra.mxu0 0.0
          %403 = vmatprep.subr.mxu0 0.0
          %404 = vmatpush1.msra.mxu0 0.0
          %405 = vmatprep.subr.mxu0 0.0
          %406 = vmatpush1.msra.mxu0 0.0
          %407 = vmatprep.subr.mxu0 0.0
          %408 = vmatpush1.msra.mxu0 0.0
          %409 = vmatprep.subr.mxu0 0.0
          %410 = vmatpush1.msra.mxu0 0.0
          %411 = vmatprep.subr.mxu0 0.0
          %412 = vmatpush1.msra.mxu0 0.0
          %413 = vmatprep.subr.mxu0 0.0
          %414 = vmatpush1.msra.mxu0 0.0
          %415 = vmatprep.subr.mxu0 0.0
          %416 = vmatpush1.msra.mxu0 0.0
          %417 = vmatprep.mubr.f32.mxu0 0.0
          %v418 = vand.u32 %v336, 4294901760
          %v419 = vsub.f32 %v336, %v418
          %v420 = vand.u32 %v419, 4294901760
          %v421 = vsub.f32 %v419, %v420
          %v422 = vand.u32 %v421, 4294901760
          %423 = vmatmul.mubr.f32.gmra.mrb[0].mxu0 %v422
          %v424 = vpop.f32.mrb[0].mxu0
          %v425 = vadd.f32 0.0, %v424
          %v426 = vpop.f32.mrb[0].mxu0
          %427 = vdwg.mxu0
          %428 = vmatprep.subr.mxu0 0.0
          %v429 = vand.u32 %v319, 4294901760
          %v430 = vsub.f32 %v319, %v429
          %v431 = vand.u32 %v430, 4294901760
          %v432 = vsub.f32 %v430, %v431
          %v433 = vand.u32 %v432, 4294901760
          %434 = vmatpush1.msra.mxu0 %v433
          %435 = vmatprep.subr.mxu0 0.0
          %v436 = vand.u32 %v320, 4294901760
          %v437 = vsub.f32 %v320, %v436
          %v438 = vand.u32 %v437, 4294901760
          %v439 = vsub.f32 %v437, %v438
          %v440 = vand.u32 %v439, 4294901760
          %441 = vmatpush1.msra.mxu0 %v440
          %442 = vmatprep.subr.mxu0 0.0
          %v443 = vand.u32 %v321, 4294901760
          %v444 = vsub.f32 %v321, %v443
          %v445 = vand.u32 %v444, 4294901760
          %v446 = vsub.f32 %v444, %v445
          %v447 = vand.u32 %v446, 4294901760
          %448 = vmatpush1.msra.mxu0 %v447
          %449 = vmatprep.subr.mxu0 0.0
          %v450 = vand.u32 %v322, 4294901760
          %v451 = vsub.f32 %v322, %v450
          %v452 = vand.u32 %v451, 4294901760
          %v453 = vsub.f32 %v451, %v452
          %v454 = vand.u32 %v453, 4294901760
          %455 = vmatpush1.msra.mxu0 %v454
          %456 = vmatprep.subr.mxu0 0.0
          %v457 = vand.u32 %v323, 4294901760
          %v458 = vsub.f32 %v323, %v457
          %v459 = vand.u32 %v458, 4294901760
          %v460 = vsub.f32 %v458, %v459
          %v461 = vand.u32 %v460, 4294901760
          %462 = vmatpush1.msra.mxu0 %v461
          %463 = vmatprep.subr.mxu0 0.0
          %v464 = vand.u32 %v324, 4294901760
          %v465 = vsub.f32 %v324, %v464
          %v466 = vand.u32 %v465, 4294901760
          %v467 = vsub.f32 %v465, %v466
          %v468 = vand.u32 %v467, 4294901760
          %469 = vmatpush1.msra.mxu0 %v468
          %470 = vmatprep.subr.mxu0 0.0
          %v471 = vand.u32 %v325, 4294901760
          %v472 = vsub.f32 %v325, %v471
          %v473 = vand.u32 %v472, 4294901760
          %v474 = vsub.f32 %v472, %v473
          %v475 = vand.u32 %v474, 4294901760
          %476 = vmatpush1.msra.mxu0 %v475
          %477 = vmatprep.subr.mxu0 0.0
          %v478 = vand.u32 %v326, 4294901760
          %v479 = vsub.f32 %v326, %v478
          %v480 = vand.u32 %v479, 4294901760
          %v481 = vsub.f32 %v479, %v480
          %v482 = vand.u32 %v481, 4294901760
          %483 = vmatpush1.msra.mxu0 %v482
          %484 = vmatprep.subr.mxu0 0.0
          %v485 = vand.u32 %v327, 4294901760
          %v486 = vsub.f32 %v327, %v485
          %v487 = vand.u32 %v486, 4294901760
          %v488 = vsub.f32 %v486, %v487
          %v489 = vand.u32 %v488, 4294901760
          %490 = vmatpush1.msra.mxu0 %v489
          %491 = vmatprep.subr.mxu0 0.0
          %v492 = vand.u32 %v328, 4294901760
          %v493 = vsub.f32 %v328, %v492
          %v494 = vand.u32 %v493, 4294901760
          %v495 = vsub.f32 %v493, %v494
          %v496 = vand.u32 %v495, 4294901760
          %497 = vmatpush1.msra.mxu0 %v496
          %498 = vmatprep.subr.mxu0 0.0
          %v499 = vand.u32 %v329, 4294901760
          %v500 = vsub.f32 %v329, %v499
          %v501 = vand.u32 %v500, 4294901760
          %v502 = vsub.f32 %v500, %v501
          %v503 = vand.u32 %v502, 4294901760
          %504 = vmatpush1.msra.mxu0 %v503
          %505 = vmatprep.subr.mxu0 0.0
          %v506 = vand.u32 %v330, 4294901760
          %v507 = vsub.f32 %v330, %v506
          %v508 = vand.u32 %v507, 4294901760
          %v509 = vsub.f32 %v507, %v508
          %v510 = vand.u32 %v509, 4294901760
          %511 = vmatpush1.msra.mxu0 %v510
          %512 = vmatprep.subr.mxu0 0.0
          %v513 = vand.u32 %v331, 4294901760
          %v514 = vsub.f32 %v331, %v513
          %v515 = vand.u32 %v514, 4294901760
          %v516 = vsub.f32 %v514, %v515
          %v517 = vand.u32 %v516, 4294901760
          %518 = vmatpush1.msra.mxu0 %v517
          %519 = vmatprep.subr.mxu0 0.0
          %v520 = vand.u32 %v332, 4294901760
          %v521 = vsub.f32 %v332, %v520
          %v522 = vand.u32 %v521, 4294901760
          %v523 = vsub.f32 %v521, %v522
          %v524 = vand.u32 %v523, 4294901760
          %525 = vmatpush1.msra.mxu0 %v524
          %526 = vmatprep.subr.mxu0 0.0
          %v527 = vand.u32 %v333, 4294901760
          %v528 = vsub.f32 %v333, %v527
          %v529 = vand.u32 %v528, 4294901760
          %v530 = vsub.f32 %v528, %v529
          %v531 = vand.u32 %v530, 4294901760
          %532 = vmatpush1.msra.mxu0 %v531
          %533 = vmatprep.subr.mxu0 0.0
          %v534 = vand.u32 %v334, 4294901760
          %v535 = vsub.f32 %v334, %v534
          %v536 = vand.u32 %v535, 4294901760
          %v537 = vsub.f32 %v535, %v536
          %v538 = vand.u32 %v537, 4294901760
          %539 = vmatpush1.msra.mxu0 %v538
          %540 = vmatprep.subr.mxu0 0.0
          %541 = vmatpush1.msra.mxu0 0.0
          %542 = vmatprep.subr.mxu0 0.0
          %543 = vmatpush1.msra.mxu0 0.0
          %544 = vmatprep.subr.mxu0 0.0
          %545 = vmatpush1.msra.mxu0 0.0
          %546 = vmatprep.subr.mxu0 0.0
          %547 = vmatpush1.msra.mxu0 0.0
          %548 = vmatprep.subr.mxu0 0.0
          %549 = vmatpush1.msra.mxu0 0.0
          %550 = vmatprep.subr.mxu0 0.0
          %551 = vmatpush1.msra.mxu0 0.0
          %552 = vmatprep.subr.mxu0 0.0
          %553 = vmatpush1.msra.mxu0 0.0
          %554 = vmatprep.subr.mxu0 0.0
          %555 = vmatpush1.msra.mxu0 0.0
          %556 = vmatprep.subr.mxu0 0.0
          %557 = vmatpush1.msra.mxu0 0.0
          %558 = vmatprep.subr.mxu0 0.0
          %559 = vmatpush1.msra.mxu0 0.0
          %560 = vmatprep.subr.mxu0 0.0
          %561 = vmatpush1.msra.mxu0 0.0
          %562 = vmatprep.subr.mxu0 0.0
          %563 = vmatpush1.msra.mxu0 0.0
          %564 = vmatprep.subr.mxu0 0.0
          %565 = vmatpush1.msra.mxu0 0.0
          %566 = vmatprep.subr.mxu0 0.0
          %567 = vmatpush1.msra.mxu0 0.0
          %568 = vmatprep.subr.mxu0 0.0
          %569 = vmatpush1.msra.mxu0 0.0
          %570 = vmatprep.subr.mxu0 0.0
          %571 = vmatpush1.msra.mxu0 0.0
          %572 = vmatprep.mubr.f32.mxu0 0.0
          %v573 = vand.u32 %v336, 4294901760
          %574 = vmatmul.mubr.f32.gmra.mrb[0].mxu0 %v573
          %v575 = vpop.f32.mrb[0].mxu0
          %v576 = vadd.f32 %v425, %v575
          %v577 = vpop.f32.mrb[0].mxu0
          %578 = vdwg.mxu0
          %579 = vmatprep.subr.mxu0 0.0
          %v580 = vand.u32 %v319, 4294901760
          %v581 = vsub.f32 %v319, %v580
          %582 = vmatpush1.msra.mxu0 %v581
          %583 = vmatprep.subr.mxu0 0.0
          %v584 = vand.u32 %v320, 4294901760
          %v585 = vsub.f32 %v320, %v584
          %586 = vmatpush1.msra.mxu0 %v585
          %587 = vmatprep.subr.mxu0 0.0
          %v588 = vand.u32 %v321, 4294901760
          %v589 = vsub.f32 %v321, %v588
          %590 = vmatpush1.msra.mxu0 %v589
          %591 = vmatprep.subr.mxu0 0.0
          %v592 = vand.u32 %v322, 4294901760
          %v593 = vsub.f32 %v322, %v592
          %594 = vmatpush1.msra.mxu0 %v593
          %595 = vmatprep.subr.mxu0 0.0
          %v596 = vand.u32 %v323, 4294901760
          %v597 = vsub.f32 %v323, %v596
          %598 = vmatpush1.msra.mxu0 %v597
          %599 = vmatprep.subr.mxu0 0.0
          %v600 = vand.u32 %v324, 4294901760
          %v601 = vsub.f32 %v324, %v600
          %602 = vmatpush1.msra.mxu0 %v601
          %603 = vmatprep.subr.mxu0 0.0
          %v604 = vand.u32 %v325, 4294901760
          %v605 = vsub.f32 %v325, %v604
          %606 = vmatpush1.msra.mxu0 %v605
          %607 = vmatprep.subr.mxu0 0.0
          %v608 = vand.u32 %v326, 4294901760
          %v609 = vsub.f32 %v326, %v608
          %610 = vmatpush1.msra.mxu0 %v609
          %611 = vmatprep.subr.mxu0 0.0
          %v612 = vand.u32 %v327, 4294901760
          %v613 = vsub.f32 %v327, %v612
          %614 = vmatpush1.msra.mxu0 %v613
          %615 = vmatprep.subr.mxu0 0.0
          %v616 = vand.u32 %v328, 4294901760
          %v617 = vsub.f32 %v328, %v616
          %618 = vmatpush1.msra.mxu0 %v617
          %619 = vmatprep.subr.mxu0 0.0
          %v620 = vand.u32 %v329, 4294901760
          %v621 = vsub.f32 %v329, %v620
          %622 = vmatpush1.msra.mxu0 %v621
          %623 = vmatprep.subr.mxu0 0.0
          %v624 = vand.u32 %v330, 4294901760
          %v625 = vsub.f32 %v330, %v624
          %626 = vmatpush1.msra.mxu0 %v625
          %627 = vmatprep.subr.mxu0 0.0
          %v628 = vand.u32 %v331, 4294901760
          %v629 = vsub.f32 %v331, %v628
          %630 = vmatpush1.msra.mxu0 %v629
          %631 = vmatprep.subr.mxu0 0.0
          %v632 = vand.u32 %v332, 4294901760
          %v633 = vsub.f32 %v332, %v632
          %634 = vmatpush1.msra.mxu0 %v633
          %635 = vmatprep.subr.mxu0 0.0
          %v636 = vand.u32 %v333, 4294901760
          %v637 = vsub.f32 %v333, %v636
          %638 = vmatpush1.msra.mxu0 %v637
          %639 = vmatprep.subr.mxu0 0.0
          %v640 = vand.u32 %v334, 4294901760
          %v641 = vsub.f32 %v334, %v640
          %642 = vmatpush1.msra.mxu0 %v641
          %643 = vmatprep.subr.mxu0 0.0
          %644 = vmatpush1.msra.mxu0 0.0
          %645 = vmatprep.subr.mxu0 0.0
          %646 = vmatpush1.msra.mxu0 0.0
          %647 = vmatprep.subr.mxu0 0.0
          %648 = vmatpush1.msra.mxu0 0.0
          %649 = vmatprep.subr.mxu0 0.0
          %650 = vmatpush1.msra.mxu0 0.0
          %651 = vmatprep.subr.mxu0 0.0
          %652 = vmatpush1.msra.mxu0 0.0
          %653 = vmatprep.subr.mxu0 0.0
          %654 = vmatpush1.msra.mxu0 0.0
          %655 = vmatprep.subr.mxu0 0.0
          %656 = vmatpush1.msra.mxu0 0.0
          %657 = vmatprep.subr.mxu0 0.0
          %658 = vmatpush1.msra.mxu0 0.0
          %659 = vmatprep.subr.mxu0 0.0
          %660 = vmatpush1.msra.mxu0 0.0
          %661 = vmatprep.subr.mxu0 0.0
          %662 = vmatpush1.msra.mxu0 0.0
          %663 = vmatprep.subr.mxu0 0.0
          %664 = vmatpush1.msra.mxu0 0.0
          %665 = vmatprep.subr.mxu0 0.0
          %666 = vmatpush1.msra.mxu0 0.0
          %667 = vmatprep.subr.mxu0 0.0
          %668 = vmatpush1.msra.mxu0 0.0
          %669 = vmatprep.subr.mxu0 0.0
          %670 = vmatpush1.msra.mxu0 0.0
          %671 = vmatprep.subr.mxu0 0.0
          %672 = vmatpush1.msra.mxu0 0.0
          %673 = vmatprep.subr.mxu0 0.0
          %674 = vmatpush1.msra.mxu0 0.0
          %675 = vmatprep.mubr.f32.mxu0 0.0
          %v676 = vand.u32 %v336, 4294901760
          %v677 = vsub.f32 %v336, %v676
          %678 = vmatmul.mubr.f32.gmra.mrb[0].mxu0 %v677
          %v679 = vpop.f32.mrb[0].mxu0
          %v680 = vadd.f32 %v576, %v679
          %v681 = vpop.f32.mrb[0].mxu0
          %682 = vdwg.mxu0
          %683 = vmatprep.subr.mxu0 0.0
          %v684 = vand.u32 %v319, 4294901760
          %685 = vmatpush1.msra.mxu0 %v684
          %686 = vmatprep.subr.mxu0 0.0
          %v687 = vand.u32 %v320, 4294901760
          %688 = vmatpush1.msra.mxu0 %v687
          %689 = vmatprep.subr.mxu0 0.0
          %v690 = vand.u32 %v321, 4294901760
          %691 = vmatpush1.msra.mxu0 %v690
          %692 = vmatprep.subr.mxu0 0.0
          %v693 = vand.u32 %v322, 4294901760
          %694 = vmatpush1.msra.mxu0 %v693
          %695 = vmatprep.subr.mxu0 0.0
          %v696 = vand.u32 %v323, 4294901760
          %697 = vmatpush1.msra.mxu0 %v696
          %698 = vmatprep.subr.mxu0 0.0
          %v699 = vand.u32 %v324, 4294901760
          %700 = vmatpush1.msra.mxu0 %v699
          %701 = vmatprep.subr.mxu0 0.0
          %v702 = vand.u32 %v325, 4294901760
          %703 = vmatpush1.msra.mxu0 %v702
          %704 = vmatprep.subr.mxu0 0.0
          %v705 = vand.u32 %v326, 4294901760
          %706 = vmatpush1.msra.mxu0 %v705
          %707 = vmatprep.subr.mxu0 0.0
          %v708 = vand.u32 %v327, 4294901760
          %709 = vmatpush1.msra.mxu0 %v708
          %710 = vmatprep.subr.mxu0 0.0
          %v711 = vand.u32 %v328, 4294901760
          %712 = vmatpush1.msra.mxu0 %v711
          %713 = vmatprep.subr.mxu0 0.0
          %v714 = vand.u32 %v329, 4294901760
          %715 = vmatpush1.msra.mxu0 %v714
          %716 = vmatprep.subr.mxu0 0.0
          %v717 = vand.u32 %v330, 4294901760
          %718 = vmatpush1.msra.mxu0 %v717
          %719 = vmatprep.subr.mxu0 0.0
          %v720 = vand.u32 %v331, 4294901760
          %721 = vmatpush1.msra.mxu0 %v720
          %722 = vmatprep.subr.mxu0 0.0
          %v723 = vand.u32 %v332, 4294901760
          %724 = vmatpush1.msra.mxu0 %v723
          %725 = vmatprep.subr.mxu0 0.0
          %v726 = vand.u32 %v333, 4294901760
          %727 = vmatpush1.msra.mxu0 %v726
          %728 = vmatprep.subr.mxu0 0.0
          %v729 = vand.u32 %v334, 4294901760
          %730 = vmatpush1.msra.mxu0 %v729
          %731 = vmatprep.subr.mxu0 0.0
          %732 = vmatpush1.msra.mxu0 0.0
          %733 = vmatprep.subr.mxu0 0.0
          %734 = vmatpush1.msra.mxu0 0.0
          %735 = vmatprep.subr.mxu0 0.0
          %736 = vmatpush1.msra.mxu0 0.0
          %737 = vmatprep.subr.mxu0 0.0
          %738 = vmatpush1.msra.mxu0 0.0
          %739 = vmatprep.subr.mxu0 0.0
          %740 = vmatpush1.msra.mxu0 0.0
          %741 = vmatprep.subr.mxu0 0.0
          %742 = vmatpush1.msra.mxu0 0.0
          %743 = vmatprep.subr.mxu0 0.0
          %744 = vmatpush1.msra.mxu0 0.0
          %745 = vmatprep.subr.mxu0 0.0
          %746 = vmatpush1.msra.mxu0 0.0
          %747 = vmatprep.subr.mxu0 0.0
          %748 = vmatpush1.msra.mxu0 0.0
          %749 = vmatprep.subr.mxu0 0.0
          %750 = vmatpush1.msra.mxu0 0.0
          %751 = vmatprep.subr.mxu0 0.0
          %752 = vmatpush1.msra.mxu0 0.0
          %753 = vmatprep.subr.mxu0 0.0
          %754 = vmatpush1.msra.mxu0 0.0
          %755 = vmatprep.subr.mxu0 0.0
          %756 = vmatpush1.msra.mxu0 0.0
          %757 = vmatprep.subr.mxu0 0.0
          %758 = vmatpush1.msra.mxu0 0.0
          %759 = vmatprep.subr.mxu0 0.0
          %760 = vmatpush1.msra.mxu0 0.0
          %761 = vmatprep.subr.mxu0 0.0
          %762 = vmatpush1.msra.mxu0 0.0
          %763 = vmatprep.mubr.f32.mxu0 0.0
          %v764 = vand.u32 %v336, 4294901760
          %v765 = vsub.f32 %v336, %v764
          %v766 = vand.u32 %v765, 4294901760
          %767 = vmatmul.mubr.f32.gmra.mrb[0].mxu0 %v766
          %v768 = vpop.f32.mrb[0].mxu0
          %v769 = vadd.f32 %v680, %v768
          %v770 = vpop.f32.mrb[0].mxu0
          %771 = vdwg.mxu0
          %772 = vmatprep.subr.mxu0 0.0
          %v773 = vand.u32 %v319, 4294901760
          %v774 = vsub.f32 %v319, %v773
          %v775 = vand.u32 %v774, 4294901760
          %776 = vmatpush1.msra.mxu0 %v775
          %777 = vmatprep.subr.mxu0 0.0
          %v778 = vand.u32 %v320, 4294901760
          %v779 = vsub.f32 %v320, %v778
          %v780 = vand.u32 %v779, 4294901760
          %781 = vmatpush1.msra.mxu0 %v780
          %782 = vmatprep.subr.mxu0 0.0
          %v783 = vand.u32 %v321, 4294901760
          %v784 = vsub.f32 %v321, %v783
          %v785 = vand.u32 %v784, 4294901760
          %786 = vmatpush1.msra.mxu0 %v785
          %787 = vmatprep.subr.mxu0 0.0
          %v788 = vand.u32 %v322, 4294901760
          %v789 = vsub.f32 %v322, %v788
          %v790 = vand.u32 %v789, 4294901760
          %791 = vmatpush1.msra.mxu0 %v790
          %792 = vmatprep.subr.mxu0 0.0
          %v793 = vand.u32 %v323, 4294901760
          %v794 = vsub.f32 %v323, %v793
          %v795 = vand.u32 %v794, 4294901760
          %796 = vmatpush1.msra.mxu0 %v795
          %797 = vmatprep.subr.mxu0 0.0
          %v798 = vand.u32 %v324, 4294901760
          %v799 = vsub.f32 %v324, %v798
          %v800 = vand.u32 %v799, 4294901760
          %801 = vmatpush1.msra.mxu0 %v800
          %802 = vmatprep.subr.mxu0 0.0
          %v803 = vand.u32 %v325, 4294901760
          %v804 = vsub.f32 %v325, %v803
          %v805 = vand.u32 %v804, 4294901760
          %806 = vmatpush1.msra.mxu0 %v805
          %807 = vmatprep.subr.mxu0 0.0
          %v808 = vand.u32 %v326, 4294901760
          %v809 = vsub.f32 %v326, %v808
          %v810 = vand.u32 %v809, 4294901760
          %811 = vmatpush1.msra.mxu0 %v810
          %812 = vmatprep.subr.mxu0 0.0
          %v813 = vand.u32 %v327, 4294901760
          %v814 = vsub.f32 %v327, %v813
          %v815 = vand.u32 %v814, 4294901760
          %816 = vmatpush1.msra.mxu0 %v815
          %817 = vmatprep.subr.mxu0 0.0
          %v818 = vand.u32 %v328, 4294901760
          %v819 = vsub.f32 %v328, %v818
          %v820 = vand.u32 %v819, 4294901760
          %821 = vmatpush1.msra.mxu0 %v820
          %822 = vmatprep.subr.mxu0 0.0
          %v823 = vand.u32 %v329, 4294901760
          %v824 = vsub.f32 %v329, %v823
          %v825 = vand.u32 %v824, 4294901760
          %826 = vmatpush1.msra.mxu0 %v825
          %827 = vmatprep.subr.mxu0 0.0
          %v828 = vand.u32 %v330, 4294901760
          %v829 = vsub.f32 %v330, %v828
          %v830 = vand.u32 %v829, 4294901760
          %831 = vmatpush1.msra.mxu0 %v830
          %832 = vmatprep.subr.mxu0 0.0
          %v833 = vand.u32 %v331, 4294901760
          %v834 = vsub.f32 %v331, %v833
          %v835 = vand.u32 %v834, 4294901760
          %836 = vmatpush1.msra.mxu0 %v835
          %837 = vmatprep.subr.mxu0 0.0
          %v838 = vand.u32 %v332, 4294901760
          %v839 = vsub.f32 %v332, %v838
          %v840 = vand.u32 %v839, 4294901760
          %841 = vmatpush1.msra.mxu0 %v840
          %842 = vmatprep.subr.mxu0 0.0
          %v843 = vand.u32 %v333, 4294901760
          %v844 = vsub.f32 %v333, %v843
          %v845 = vand.u32 %v844, 4294901760
          %846 = vmatpush1.msra.mxu0 %v845
          %847 = vmatprep.subr.mxu0 0.0
          %v848 = vand.u32 %v334, 4294901760
          %v849 = vsub.f32 %v334, %v848
          %v850 = vand.u32 %v849, 4294901760
          %851 = vmatpush1.msra.mxu0 %v850
          %852 = vmatprep.subr.mxu0 0.0
          %853 = vmatpush1.msra.mxu0 0.0
          %854 = vmatprep.subr.mxu0 0.0
          %855 = vmatpush1.msra.mxu0 0.0
          %856 = vmatprep.subr.mxu0 0.0
          %857 = vmatpush1.msra.mxu0 0.0
          %858 = vmatprep.subr.mxu0 0.0
          %859 = vmatpush1.msra.mxu0 0.0
          %860 = vmatprep.subr.mxu0 0.0
          %861 = vmatpush1.msra.mxu0 0.0
          %862 = vmatprep.subr.mxu0 0.0
          %863 = vmatpush1.msra.mxu0 0.0
          %864 = vmatprep.subr.mxu0 0.0
          %865 = vmatpush1.msra.mxu0 0.0
          %866 = vmatprep.subr.mxu0 0.0
          %867 = vmatpush1.msra.mxu0 0.0
          %868 = vmatprep.subr.mxu0 0.0
          %869 = vmatpush1.msra.mxu0 0.0
          %870 = vmatprep.subr.mxu0 0.0
          %871 = vmatpush1.msra.mxu0 0.0
          %872 = vmatprep.subr.mxu0 0.0
          %873 = vmatpush1.msra.mxu0 0.0
          %874 = vmatprep.subr.mxu0 0.0
          %875 = vmatpush1.msra.mxu0 0.0
          %876 = vmatprep.subr.mxu0 0.0
          %877 = vmatpush1.msra.mxu0 0.0
          %878 = vmatprep.subr.mxu0 0.0
          %879 = vmatpush1.msra.mxu0 0.0
          %880 = vmatprep.subr.mxu0 0.0
          %881 = vmatpush1.msra.mxu0 0.0
          %882 = vmatprep.subr.mxu0 0.0
          %883 = vmatpush1.msra.mxu0 0.0
          %884 = vmatprep.mubr.f32.mxu0 0.0
          %v885 = vand.u32 %v336, 4294901760
          %886 = vmatmul.mubr.f32.gmra.mrb[0].mxu0 %v885
          %v887 = vpop.f32.mrb[0].mxu0
          %v888 = vadd.f32 %v769, %v887
          %v889 = vpop.f32.mrb[0].mxu0
          %890 = vdwg.mxu0
          %891 = vmatprep.subr.mxu0 0.0
          %v892 = vand.u32 %v319, 4294901760
          %893 = vmatpush1.msra.mxu0 %v892
          %894 = vmatprep.subr.mxu0 0.0
          %v895 = vand.u32 %v320, 4294901760
          %896 = vmatpush1.msra.mxu0 %v895
          %897 = vmatprep.subr.mxu0 0.0
          %v898 = vand.u32 %v321, 4294901760
          %899 = vmatpush1.msra.mxu0 %v898
          %900 = vmatprep.subr.mxu0 0.0
          %v901 = vand.u32 %v322, 4294901760
          %902 = vmatpush1.msra.mxu0 %v901
          %903 = vmatprep.subr.mxu0 0.0
          %v904 = vand.u32 %v323, 4294901760
          %905 = vmatpush1.msra.mxu0 %v904
          %906 = vmatprep.subr.mxu0 0.0
          %v907 = vand.u32 %v324, 4294901760
          %908 = vmatpush1.msra.mxu0 %v907
          %909 = vmatprep.subr.mxu0 0.0
          %v910 = vand.u32 %v325, 4294901760
          %911 = vmatpush1.msra.mxu0 %v910
          %912 = vmatprep.subr.mxu0 0.0
          %v913 = vand.u32 %v326, 4294901760
          %914 = vmatpush1.msra.mxu0 %v913
          %915 = vmatprep.subr.mxu0 0.0
          %v916 = vand.u32 %v327, 4294901760
          %917 = vmatpush1.msra.mxu0 %v916
          %918 = vmatprep.subr.mxu0 0.0
          %v919 = vand.u32 %v328, 4294901760
          %920 = vmatpush1.msra.mxu0 %v919
          %921 = vmatprep.subr.mxu0 0.0
          %v922 = vand.u32 %v329, 4294901760
          %923 = vmatpush1.msra.mxu0 %v922
          %924 = vmatprep.subr.mxu0 0.0
          %v925 = vand.u32 %v330, 4294901760
          %926 = vmatpush1.msra.mxu0 %v925
          %927 = vmatprep.subr.mxu0 0.0
          %v928 = vand.u32 %v331, 4294901760
          %929 = vmatpush1.msra.mxu0 %v928
          %930 = vmatprep.subr.mxu0 0.0
          %v931 = vand.u32 %v332, 4294901760
          %932 = vmatpush1.msra.mxu0 %v931
          %933 = vmatprep.subr.mxu0 0.0
          %v934 = vand.u32 %v333, 4294901760
          %935 = vmatpush1.msra.mxu0 %v934
          %936 = vmatprep.subr.mxu0 0.0
          %v937 = vand.u32 %v334, 4294901760
          %938 = vmatpush1.msra.mxu0 %v937
          %939 = vmatprep.subr.mxu0 0.0
          %940 = vmatpush1.msra.mxu0 0.0
          %941 = vmatprep.subr.mxu0 0.0
          %942 = vmatpush1.msra.mxu0 0.0
          %943 = vmatprep.subr.mxu0 0.0
          %944 = vmatpush1.msra.mxu0 0.0
          %945 = vmatprep.subr.mxu0 0.0
          %946 = vmatpush1.msra.mxu0 0.0
          %947 = vmatprep.subr.mxu0 0.0
          %948 = vmatpush1.msra.mxu0 0.0
          %949 = vmatprep.subr.mxu0 0.0
          %950 = vmatpush1.msra.mxu0 0.0
          %951 = vmatprep.subr.mxu0 0.0
          %952 = vmatpush1.msra.mxu0 0.0
          %953 = vmatprep.subr.mxu0 0.0
          %954 = vmatpush1.msra.mxu0 0.0
          %955 = vmatprep.subr.mxu0 0.0
          %956 = vmatpush1.msra.mxu0 0.0
          %957 = vmatprep.subr.mxu0 0.0
          %958 = vmatpush1.msra.mxu0 0.0
          %959 = vmatprep.subr.mxu0 0.0
          %960 = vmatpush1.msra.mxu0 0.0
          %961 = vmatprep.subr.mxu0 0.0
          %962 = vmatpush1.msra.mxu0 0.0
          %963 = vmatprep.subr.mxu0 0.0
          %964 = vmatpush1.msra.mxu0 0.0
          %965 = vmatprep.subr.mxu0 0.0
          %966 = vmatpush1.msra.mxu0 0.0
          %967 = vmatprep.subr.mxu0 0.0
          %968 = vmatpush1.msra.mxu0 0.0
          %969 = vmatprep.subr.mxu0 0.0
          %970 = vmatpush1.msra.mxu0 0.0
          %971 = vmatprep.mubr.f32.mxu0 0.0
          %v972 = vand.u32 %v336, 4294901760
          %973 = vmatmul.mubr.f32.gmra.mrb[0].mxu0 %v972
          %v974 = vpop.f32.mrb[0].mxu0
          %v975 = vadd.f32 %v888, %v974
          %v976 = vpop.f32.mrb[0].mxu0
          %977 = vdwg.mxu0
          %v978 = vadd.f32 %v335, %v975
          %979 = vst [vmem:[%s206] sm:$0xf] %v978
        $region40: #{tpu_custom_call.1} parent=27 // pred_fallthru
          _
        %s980 = sand.u32 %s109, 1
        %s981 = scalar_lea.sflag [#allocation7], %s980
        %s982 = sand.u32 %s109, 1
        %s983 = smul.addr %s982, 4
        %s984 = scalar_lea.vmem [#allocation8], %s983
        // Predicated region
        $region41: #{tpu_custom_call.1} parent=27 // pred_check
          %p985 = pneg %p119
        $region42: #{tpu_custom_call.1} parent=27 // pred_check_branch
          %987 = sbr.rel (%p985) target = $region44
        $region43: #{tpu_custom_call.1} parent=27 // pred_region
          %s989 = ssub.s32 64, 64
          %990 = vsyncadd %s981, %s989
          %s991 = sadd.s32 %s30, %s29
          %s992 = smul.addr %s991, 64
          %s993 = scalar_lea.hbm %s3, %s992
          %s995 = sshll.u32 %s984, 4
          %s996 = int_to_ptr.vmem [resolvable:$true] %s995
          %998 = dma.vmem_to_hbm [thread:$0]  %s996, 64, %s993, %s981
        $region44: #{tpu_custom_call.1} parent=27 // pred_fallthru
          _
      $region28: #{tpu_custom_call.1} parent=5 // pred_fallthru
        _
      %p999 = scmp.le.s32.totalorder 2, %s19
      // Predicated region
      $region45: #{tpu_custom_call.1} parent=5 // pred_check
        %p1000 = pneg %p999
      $region46: #{tpu_custom_call.1} parent=5 // pred_check_branch
        %1002 = sbr.rel (%p1000) target = $region48
      $region47: #{tpu_custom_call.1} parent=5 // pred_region
        %s1003 = ssub.s32 %s19, 2
        // Predicated region
        $region49: #{tpu_custom_call.1} parent=47 // pred_check
          %p1004 = pneg %p125
        $region50: #{tpu_custom_call.1} parent=47 // pred_check_branch
          %1006 = sbr.rel (%p1004) target = $region52
        $region51: #{tpu_custom_call.1} parent=47 // pred_region
          %s1007 = sand.u32 %s110, 1
          %s1008 = scalar_lea.sflag [#allocation7], %s1007
          %s1009 = sand.u32 %s110, 1
          %s1010 = smul.addr %s1009, 4
          %s1011 = scalar_lea.vmem [#allocation8], %s1010
          %1012 = dma.done %s1008, 64
        $region52: #{tpu_custom_call.1} parent=47 // pred_fallthru
          _
      $region48: #{tpu_custom_call.1} parent=5 // pred_fallthru
        _
    $region6: #{tpu_custom_call.1} parent=1 // loop_footer
      %s23 = sadd.s32 1, %s19
    $region7: #{tpu_custom_call.1} parent=1 // loop_footer_branch
      %18 = sbr.rel target = $region3
    $region8: #{tpu_custom_call.1} parent=1 // loop_exit
      _
    %1013 = vsyncpa [#allocation6], 1
    %s1014 = scalar_lea.sflag [#allocation6], 1
    %1015 = vsyncpa %s1014, 1
    %1016 = vsyncpa [#allocation7], 1
    %s1017 = scalar_lea.sflag [#allocation7], 1
    %1018 = vsyncpa %s1017, 1

</llo_original>
